<compile_context>
chip_gen: v6e
topology: v6e:2x2x1
jax: 0.10.0
libtpu: 0.0.40
codegen_flags: <defaults>
</compile_context>

<pallas_src>
import functools
import math

import jax
import jax.numpy as jnp
from jax.experimental import pallas as pl
from jax.experimental.pallas import tpu as pltpu

_LN_EPS = 1e-5                       # PyTorch nn.LayerNorm default
_SQRT_HALF = 1.0 / math.sqrt(2.0)

# Row layout of the packed constants array (shape (_CONST_ROWS, d_model)).
_ROW_WB = 0          # rows 0..3 : box-projection weight rows (Wb.T), VPU FMAs
_ROW_B_DET = 4
_ROW_B_REC = 5
_ROW_B_BOX = 6
_ROW_G_DET = 7
_ROW_G_REC = 8
_ROW_G_BOX = 9
_ROW_BETA_SUM = 10   # ln_det_b + ln_rec_b + ln_box_b (pre-summed host-side)
_CONST_ROWS = 16     # padded to a sublane multiple


def _ln_scaled(x, gamma):
    """(x - mean) * rsqrt(var + eps) * gamma   (beta is added later, pre-summed)."""
    mean = jnp.mean(x, axis=-1, keepdims=True)
    ctr = x - mean
    var = jnp.mean(ctr * ctr, axis=-1, keepdims=True)
    return ctr * jax.lax.rsqrt(var + _LN_EPS) * gamma


def _gelu(x, approximate):
    if approximate:
        # tanh approximation lowers to the EUP slot (cheaper when VALU-bound).
        return jax.nn.gelu(x, approximate=True)
    # PyTorch nn.GELU() default: exact erf.
    return 0.5 * x * (1.0 + jax.lax.erf(x * _SQRT_HALF))


def _embedding_kernel(det_ref, rec_ref, box_ref, wd_ref, wr_ref, c_ref,
                      out_ref, *, approximate_gelu):
    # Current grid point: (batch b, seq tile t); refs are per-(b, t) tiles.
    xd = det_ref[0]          # (tile, d_det)
    xr = rec_ref[0]          # (tile, d_rec)
    xb = box_ref[0]          # (tile, 4)
    c = c_ref[...]           # (16, d_model) packed constants

    # det / rec projections on the MXU — weights pre-transposed ([in, out]),
    # so there are no in-kernel transposes.
    det = (jnp.dot(xd, wd_ref[...], preferred_element_type=jnp.float32)
           + c[_ROW_B_DET:_ROW_B_DET + 1])
    rec = (jnp.dot(xr, wr_ref[...], preferred_element_type=jnp.float32)
           + c[_ROW_B_REC:_ROW_B_REC + 1])

    # Box projection (K == 4): 4 broadcast FMAs on the VPU instead of a
    # near-empty MXU pass.
    box = (xb[:, 0:1] * c[0:1]
           + xb[:, 1:2] * c[1:2]
           + xb[:, 2:3] * c[2:3]
           + xb[:, 3:4] * c[3:4]
           + c[_ROW_B_BOX:_ROW_B_BOX + 1])

    # Per-branch LayerNorm (gamma folded in), single pre-summed beta add.
    y = (_ln_scaled(det, c[_ROW_G_DET:_ROW_G_DET + 1])
         + _ln_scaled(rec, c[_ROW_G_REC:_ROW_G_REC + 1])
         + _ln_scaled(box, c[_ROW_G_BOX:_ROW_G_BOX + 1])
         + c[_ROW_BETA_SUM:_ROW_BETA_SUM + 1])

    out_ref[0] = _gelu(y, approximate_gelu).astype(out_ref.dtype)


def _round_up(x, m):
    return ((x + m - 1) // m) * m


def prepare_params(params):
    """One-time host-side layout plumbing (call once, reuse per forward)."""
    d_model, d_det = params["w_det"].shape
    d_rec = params["w_rec"].shape[1]

    wd = jnp.asarray(params["w_det"], jnp.float32).T      # (d_det, d_model)
    wr = jnp.asarray(params["w_rec"], jnp.float32).T      # (d_rec, d_model)
    wb_t = jnp.asarray(params["w_box"], jnp.float32).T    # (4, d_model)

    beta_sum = (params["ln_det_b"] + params["ln_rec_b"] + params["ln_box_b"])

    consts = jnp.zeros((_CONST_ROWS, d_model), jnp.float32)
    consts = consts.at[_ROW_WB:_ROW_WB + 4].set(wb_t)
    consts = consts.at[_ROW_B_DET].set(jnp.asarray(params["b_det"], jnp.float32))
    consts = consts.at[_ROW_B_REC].set(jnp.asarray(params["b_rec"], jnp.float32))
    consts = consts.at[_ROW_B_BOX].set(jnp.asarray(params["b_box"], jnp.float32))
    consts = consts.at[_ROW_G_DET].set(jnp.asarray(params["ln_det_g"], jnp.float32))
    consts = consts.at[_ROW_G_REC].set(jnp.asarray(params["ln_rec_g"], jnp.float32))
    consts = consts.at[_ROW_G_BOX].set(jnp.asarray(params["ln_box_g"], jnp.float32))
    consts = consts.at[_ROW_BETA_SUM].set(jnp.asarray(beta_sum, jnp.float32))

    return {"wd": wd, "wr": wr, "consts": consts,
            "d_det": d_det, "d_rec": d_rec, "d_model": d_model}


def vision_ocr_embedding(det_features, rec_features, boxes, prepared, *,
                         seq_tile=None, approximate_gelu=False,
                         out_dtype=jnp.float32):
    """Fused Pallas forward of VisionOcrEmbedding (eval mode).

    det_features: (B, N, d_det) f32
    rec_features: (B, N, d_rec) f32
    boxes:        (B, N, 4)     f32
    prepared:     output of prepare_params().
    """
    B, N, d_det = det_features.shape
    d_rec = rec_features.shape[-1]
    d_model = prepared["d_model"]
    wd, wr, consts = prepared["wd"], prepared["wr"], prepared["consts"]

    in_bytes = 4
    out_bytes = jnp.dtype(out_dtype).itemsize

    def footprint(tile):
        # Double-buffered inputs + output + (double-buffered) weights/consts.
        io = (2 * tile * (d_det + d_rec + 4) * in_bytes
              + 2 * tile * d_model * out_bytes)
        w = 2 * ((d_det + d_rec) * d_model * 4 + _CONST_ROWS * d_model * 4)
        return io + w

    if seq_tile is None:
        # Fixed cap (not N): keeps the step footprint within scoped VMEM on
        # every generation and keeps the grid >= 2 steps for pipelining /
        # megacore.  Ragged tails are handled by the cdiv grid + masked stores.
        seq_tile = min(512, _round_up(N, 8))
        while seq_tile > 8 and footprint(seq_tile) > (24 << 20):
            seq_tile //= 2
    seq_tile = max(8, _round_up(seq_tile, 8))

    vmem_limit = min(max(int(1.5 * footprint(seq_tile)) + (1 << 20), 32 << 20),
                     64 << 20)

    grid = (B, pl.cdiv(N, seq_tile))

    def seq_map(b, t):
        return (b, t, 0)

    def const_map(b, t):
        return (0, 0)

    in_specs = [
        pl.BlockSpec((1, seq_tile, d_det), seq_map),      # det_features
        pl.BlockSpec((1, seq_tile, d_rec), seq_map),      # rec_features
        pl.BlockSpec((1, seq_tile, 4), seq_map),          # boxes
        pl.BlockSpec((d_det, d_model), const_map),        # Wd (pre-transposed)
        pl.BlockSpec((d_rec, d_model), const_map),        # Wr (pre-transposed)
        pl.BlockSpec((_CONST_ROWS, d_model), const_map),  # packed constants
    ]
    out_specs = pl.BlockSpec((1, seq_tile, d_model), seq_map)
    out_shape = jax.ShapeDtypeStruct((B, N, d_model), out_dtype)

    kernel = functools.partial(_embedding_kernel,
                               approximate_gelu=approximate_gelu)

    return pl.pallas_call(
        kernel,
        grid=grid,
        in_specs=in_specs,
        out_specs=out_specs,
        out_shape=out_shape,
        compiler_params=pltpu.CompilerParams(
            dimension_semantics=("parallel", "parallel"),
            vmem_limit_bytes=vmem_limit),
    )(det_features, rec_features, boxes, wd, wr, consts)


# ----------------------------------------------------------------------------
# Parameter init (PyTorch nn.Linear / nn.LayerNorm conventions) and reference.
# ----------------------------------------------------------------------------

def _uniform_linear(key, out_features, in_features):
    # PyTorch nn.Linear default init: U(-1/sqrt(in), 1/sqrt(in)) for W and b.
    bound = 1.0 / math.sqrt(in_features)
    kw, kb = jax.random.split(key)
    w = jax.random.uniform(kw, (out_features, in_features), jnp.float32,
                           minval=-bound, maxval=bound)
    b = jax.random.uniform(kb, (out_features,), jnp.float32,
                           minval=-bound, maxval=bound)
    return w, b


def init_params(key, d_det, d_rec, d_model):
    kd, kr, kb, kg = jax.random.split(key, 4)
    w_det, b_det = _uniform_linear(kd, d_model, d_det)
    w_rec, b_rec = _uniform_linear(kr, d_model, d_rec)
    w_box, b_box = _uniform_linear(kb, d_model, 4)
    # Perturb LN affine params slightly so the test exercises gamma/beta paths
    # (PyTorch default is gamma=1, beta=0).
    g = jax.random.split(kg, 6)
    return {
        "w_det": w_det, "b_det": b_det,
        "w_rec": w_rec, "b_rec": b_rec,
        "w_box": w_box, "b_box": b_box,
        "ln_det_g": 1.0 + 0.1 * jax.random.normal(g[0], (d_model,), jnp.float32),
        "ln_det_b": 0.1 * jax.random.normal(g[1], (d_model,), jnp.float32),
        "ln_rec_g": 1.0 + 0.1 * jax.random.normal(g[2], (d_model,), jnp.float32),
        "ln_rec_b": 0.1 * jax.random.normal(g[3], (d_model,), jnp.float32),
        "ln_box_g": 1.0 + 0.1 * jax.random.normal(g[4], (d_model,), jnp.float32),
        "ln_box_b": 0.1 * jax.random.normal(g[5], (d_model,), jnp.float32),
    }


def _reference(det_features, rec_features, boxes, params):
    """Plain-JAX mirror of the PyTorch forward (eval mode)."""
    def ln(x, g, b):
        mean = jnp.mean(x, axis=-1, keepdims=True)
        var = jnp.mean((x - mean) ** 2, axis=-1, keepdims=True)
        return (x - mean) * jax.lax.rsqrt(var + _LN_EPS) * g + b

    det = det_features @ params["w_det"].T + params["b_det"]
    rec = rec_features @ params["w_rec"].T + params["b_rec"]
    box = boxes @ params["w_box"].T + params["b_box"]
    y = (ln(det, params["ln_det_g"], params["ln_det_b"])
         + ln(rec, params["ln_rec_g"], params["ln_rec_b"])
         + ln(box, params["ln_box_g"], params["ln_box_b"]))
    return 0.5 * y * (1.0 + jax.lax.erf(y * _SQRT_HALF))


if __name__ == "__main__":
    # Small demo shapes: batch=2, seq=8, d_det=16, d_rec=48, d_model=32.
    B, N, d_det, d_rec, d_model = 2, 8, 16, 48, 32

    key = jax.random.PRNGKey(0)
    kp, k1, k2, k3, k4, k5, k6 = jax.random.split(key, 7)
    params = init_params(kp, d_det, d_rec, d_model)
    prepared = prepare_params(params)

    det_features = jax.random.normal(k1, (B, N, d_det), dtype=jnp.float32)
    rec_features = jax.random.normal(k2, (B, N, d_rec), dtype=jnp.float32)
    boxes = jax.random.uniform(k3, (B, N, 4), dtype=jnp.float32)

    out = vision_ocr_embedding(det_features, rec_features, boxes, prepared)
    out = jax.block_until_ready(out)
    ref = _reference(det_features, rec_features, boxes, params)
    assert out.shape == (B, N, d_model)
    assert jnp.allclose(out, ref, atol=1e-5, rtol=1e-5), (
        float(jnp.max(jnp.abs(out - ref))))

    # Ragged-sequence test: N not divisible by the tile -> cdiv grid + masked
    # tail writes (forces a 2-step sequence grid with seq_tile=8).
    N2 = 13
    det2 = jax.random.normal(k4, (B, N2, d_det), dtype=jnp.float32)
    rec2 = jax.random.normal(k5, (B, N2, d_rec), dtype=jnp.float32)
    box2 = jax.random.uniform(k6, (B, N2, 4), dtype=jnp.float32)
    out2 = vision_ocr_embedding(det2, rec2, box2, prepared, seq_tile=8)
    out2 = jax.block_until_ready(out2)
    ref2 = _reference(det2, rec2, box2, params)
    assert out2.shape == (B, N2, d_model)
    assert jnp.allclose(out2, ref2, atol=1e-5, rtol=1e-5), (
        float(jnp.max(jnp.abs(out2 - ref2))))

    print("KERNEL_OK")
</pallas_src>

<mosaic_0001>
module attributes {stable_mosaic.version = 11 : i64} {
  func.func @_embedding_kernel(%arg0: i32, %arg1: i32, %arg2: memref<1x8x16xf32, #tpu.memory_space<vmem>>, %arg3: memref<1x8x48xf32, #tpu.memory_space<vmem>>, %arg4: memref<1x8x4xf32, #tpu.memory_space<vmem>>, %arg5: memref<16x32xf32, #tpu.memory_space<vmem>>, %arg6: memref<48x32xf32, #tpu.memory_space<vmem>>, %arg7: memref<16x32xf32, #tpu.memory_space<vmem>>, %arg8: memref<1x8x32xf32, #tpu.memory_space<vmem>>) attributes {dimension_semantics = [#tpu.dimension_semantics<parallel>, #tpu.dimension_semantics<parallel>], iteration_bounds = array<i64: 2, 1>, scalar_prefetch = 0 : i64, scratch_operands = 0 : i64, tpu.core_type = #tpu.core_type<tc>, window_params = [{transform_indices = @transform_0, window_bounds = array<i64: 1, 8, 16>}, {transform_indices = @transform_1, window_bounds = array<i64: 1, 8, 48>}, {transform_indices = @transform_2, window_bounds = array<i64: 1, 8, 4>}, {pipeline_mode = #tpu.pipeline_mode<synchronous>, transform_indices = @transform_3, window_bounds = array<i64: 16, 32>}, {pipeline_mode = #tpu.pipeline_mode<synchronous>, transform_indices = @transform_4, window_bounds = array<i64: 48, 32>}, {pipeline_mode = #tpu.pipeline_mode<synchronous>, transform_indices = @transform_5, window_bounds = array<i64: 16, 32>}, {transform_indices = @transform_6, window_bounds = array<i64: 1, 8, 32>}]} {
    %c0 = arith.constant 0 : index
    %c0_0 = arith.constant 0 : index
    %c0_1 = arith.constant 0 : index
    %0 = vector.load %arg2[%c0, %c0_0, %c0_1] : memref<1x8x16xf32, #tpu.memory_space<vmem>>, vector<1x8x16xf32>
    %1 = vector.shape_cast %0 : vector<1x8x16xf32> to vector<8x16xf32>
    %c0_2 = arith.constant 0 : index
    %c0_3 = arith.constant 0 : index
    %c0_4 = arith.constant 0 : index
    %2 = vector.load %arg3[%c0_2, %c0_3, %c0_4] : memref<1x8x48xf32, #tpu.memory_space<vmem>>, vector<1x8x48xf32>
    %3 = vector.shape_cast %2 : vector<1x8x48xf32> to vector<8x48xf32>
    %c0_5 = arith.constant 0 : index
    %c0_6 = arith.constant 0 : index
    %c0_7 = arith.constant 0 : index
    %4 = vector.load %arg4[%c0_5, %c0_6, %c0_7] : memref<1x8x4xf32, #tpu.memory_space<vmem>>, vector<1x8x4xf32>
    %5 = vector.shape_cast %4 : vector<1x8x4xf32> to vector<8x4xf32>
    %c0_8 = arith.constant 0 : index
    %c0_9 = arith.constant 0 : index
    %6 = vector.load %arg7[%c0_8, %c0_9] : memref<16x32xf32, #tpu.memory_space<vmem>>, vector<16x32xf32>
    %c0_10 = arith.constant 0 : index
    %c0_11 = arith.constant 0 : index
    %7 = vector.load %arg5[%c0_10, %c0_11] : memref<16x32xf32, #tpu.memory_space<vmem>>, vector<16x32xf32>
    %cst = arith.constant dense<0.000000e+00> : vector<8x32xf32>
    %8 = tpu.matmul %1, %7, %cst {dimension_numbers = #tpu.dot_dimension_numbers<[1], [0], [0], [1], [0, 0, 1, 1], [], []>} : vector<8x16xf32>, vector<16x32xf32>, vector<8x32xf32> -> vector<8x32xf32>
    %9 = vector.extract_strided_slice %6 {offsets = [4, 0], sizes = [1, 32], strides = [1, 1]} : vector<16x32xf32> to vector<1x32xf32>
    %10 = vector.broadcast %9 : vector<1x32xf32> to vector<8x32xf32>
    %11 = arith.addf %8, %10 : vector<8x32xf32>
    %c0_12 = arith.constant 0 : index
    %c0_13 = arith.constant 0 : index
    %12 = vector.load %arg6[%c0_12, %c0_13] : memref<48x32xf32, #tpu.memory_space<vmem>>, vector<48x32xf32>
    %cst_14 = arith.constant dense<0.000000e+00> : vector<8x32xf32>
    %13 = tpu.matmul %3, %12, %cst_14 {dimension_numbers = #tpu.dot_dimension_numbers<[1], [0], [0], [1], [0, 0, 1, 1], [], []>} : vector<8x48xf32>, vector<48x32xf32>, vector<8x32xf32> -> vector<8x32xf32>
    %14 = vector.extract_strided_slice %6 {offsets = [5, 0], sizes = [1, 32], strides = [1, 1]} : vector<16x32xf32> to vector<1x32xf32>
    %15 = vector.broadcast %14 : vector<1x32xf32> to vector<8x32xf32>
    %16 = arith.addf %13, %15 : vector<8x32xf32>
    %17 = vector.extract_strided_slice %5 {offsets = [0, 0], sizes = [8, 1], strides = [1, 1]} : vector<8x4xf32> to vector<8x1xf32>
    %18 = vector.extract_strided_slice %6 {offsets = [0, 0], sizes = [1, 32], strides = [1, 1]} : vector<16x32xf32> to vector<1x32xf32>
    %19 = vector.broadcast %17 : vector<8x1xf32> to vector<8x32xf32>
    %20 = vector.broadcast %18 : vector<1x32xf32> to vector<8x32xf32>
    %21 = arith.mulf %19, %20 : vector<8x32xf32>
    %22 = vector.extract_strided_slice %5 {offsets = [0, 1], sizes = [8, 1], strides = [1, 1]} : vector<8x4xf32> to vector<8x1xf32>
    %23 = vector.extract_strided_slice %6 {offsets = [1, 0], sizes = [1, 32], strides = [1, 1]} : vector<16x32xf32> to vector<1x32xf32>
    %24 = vector.broadcast %22 : vector<8x1xf32> to vector<8x32xf32>
    %25 = vector.broadcast %23 : vector<1x32xf32> to vector<8x32xf32>
    %26 = arith.mulf %24, %25 : vector<8x32xf32>
    %27 = arith.addf %21, %26 : vector<8x32xf32>
    %28 = vector.extract_strided_slice %5 {offsets = [0, 2], sizes = [8, 1], strides = [1, 1]} : vector<8x4xf32> to vector<8x1xf32>
    %29 = vector.extract_strided_slice %6 {offsets = [2, 0], sizes = [1, 32], strides = [1, 1]} : vector<16x32xf32> to vector<1x32xf32>
    %30 = vector.broadcast %28 : vector<8x1xf32> to vector<8x32xf32>
    %31 = vector.broadcast %29 : vector<1x32xf32> to vector<8x32xf32>
    %32 = arith.mulf %30, %31 : vector<8x32xf32>
    %33 = arith.addf %27, %32 : vector<8x32xf32>
    %34 = vector.extract_strided_slice %5 {offsets = [0, 3], sizes = [8, 1], strides = [1, 1]} : vector<8x4xf32> to vector<8x1xf32>
    %35 = vector.extract_strided_slice %6 {offsets = [3, 0], sizes = [1, 32], strides = [1, 1]} : vector<16x32xf32> to vector<1x32xf32>
    %36 = vector.broadcast %34 : vector<8x1xf32> to vector<8x32xf32>
    %37 = vector.broadcast %35 : vector<1x32xf32> to vector<8x32xf32>
    %38 = arith.mulf %36, %37 : vector<8x32xf32>
    %39 = arith.addf %33, %38 : vector<8x32xf32>
    %40 = vector.extract_strided_slice %6 {offsets = [6, 0], sizes = [1, 32], strides = [1, 1]} : vector<16x32xf32> to vector<1x32xf32>
    %41 = vector.broadcast %40 : vector<1x32xf32> to vector<8x32xf32>
    %42 = arith.addf %39, %41 : vector<8x32xf32>
    %43 = vector.extract_strided_slice %6 {offsets = [7, 0], sizes = [1, 32], strides = [1, 1]} : vector<16x32xf32> to vector<1x32xf32>
    %cst_15 = arith.constant dense<0.000000e+00> : vector<8xf32>
    %44 = vector.multi_reduction <add>, %11, %cst_15 [1] : vector<8x32xf32> to vector<8xf32>
    %45 = vector.shape_cast %44 : vector<8xf32> to vector<8x1xf32>
    %cst_16 = arith.constant 3.200000e+01 : f32
    %46 = vector.broadcast %cst_16 : f32 to vector<8x1xf32>
    %47 = arith.divf %45, %46 : vector<8x1xf32>
    %48 = vector.broadcast %47 : vector<8x1xf32> to vector<8x32xf32>
    %49 = arith.subf %11, %48 : vector<8x32xf32>
    %50 = arith.mulf %49, %49 : vector<8x32xf32>
    %cst_17 = arith.constant dense<0.000000e+00> : vector<8xf32>
    %51 = vector.multi_reduction <add>, %50, %cst_17 [1] : vector<8x32xf32> to vector<8xf32>
    %52 = vector.shape_cast %51 : vector<8xf32> to vector<8x1xf32>
    %cst_18 = arith.constant 3.200000e+01 : f32
    %53 = vector.broadcast %cst_18 : f32 to vector<8x1xf32>
    %54 = arith.divf %52, %53 : vector<8x1xf32>
    %cst_19 = arith.constant 9.99999974E-6 : f32
    %55 = vector.broadcast %cst_19 : f32 to vector<8x1xf32>
    %56 = arith.addf %54, %55 : vector<8x1xf32>
    %57 = math.rsqrt %56 : vector<8x1xf32>
    %58 = vector.broadcast %57 : vector<8x1xf32> to vector<8x32xf32>
    %59 = arith.mulf %49, %58 : vector<8x32xf32>
    %60 = vector.broadcast %43 : vector<1x32xf32> to vector<8x32xf32>
    %61 = arith.mulf %59, %60 : vector<8x32xf32>
    %62 = vector.extract_strided_slice %6 {offsets = [8, 0], sizes = [1, 32], strides = [1, 1]} : vector<16x32xf32> to vector<1x32xf32>
    %cst_20 = arith.constant dense<0.000000e+00> : vector<8xf32>
    %63 = vector.multi_reduction <add>, %16, %cst_20 [1] : vector<8x32xf32> to vector<8xf32>
    %64 = vector.shape_cast %63 : vector<8xf32> to vector<8x1xf32>
    %cst_21 = arith.constant 3.200000e+01 : f32
    %65 = vector.broadcast %cst_21 : f32 to vector<8x1xf32>
    %66 = arith.divf %64, %65 : vector<8x1xf32>
    %67 = vector.broadcast %66 : vector<8x1xf32> to vector<8x32xf32>
    %68 = arith.subf %16, %67 : vector<8x32xf32>
    %69 = arith.mulf %68, %68 : vector<8x32xf32>
    %cst_22 = arith.constant dense<0.000000e+00> : vector<8xf32>
    %70 = vector.multi_reduction <add>, %69, %cst_22 [1] : vector<8x32xf32> to vector<8xf32>
    %71 = vector.shape_cast %70 : vector<8xf32> to vector<8x1xf32>
    %cst_23 = arith.constant 3.200000e+01 : f32
    %72 = vector.broadcast %cst_23 : f32 to vector<8x1xf32>
    %73 = arith.divf %71, %72 : vector<8x1xf32>
    %cst_24 = arith.constant 9.99999974E-6 : f32
    %74 = vector.broadcast %cst_24 : f32 to vector<8x1xf32>
    %75 = arith.addf %73, %74 : vector<8x1xf32>
    %76 = math.rsqrt %75 : vector<8x1xf32>
    %77 = vector.broadcast %76 : vector<8x1xf32> to vector<8x32xf32>
    %78 = arith.mulf %68, %77 : vector<8x32xf32>
    %79 = vector.broadcast %62 : vector<1x32xf32> to vector<8x32xf32>
    %80 = arith.mulf %78, %79 : vector<8x32xf32>
    %81 = arith.addf %61, %80 : vector<8x32xf32>
    %82 = vector.extract_strided_slice %6 {offsets = [9, 0], sizes = [1, 32], strides = [1, 1]} : vector<16x32xf32> to vector<1x32xf32>
    %cst_25 = arith.constant dense<0.000000e+00> : vector<8xf32>
    %83 = vector.multi_reduction <add>, %42, %cst_25 [1] : vector<8x32xf32> to vector<8xf32>
    %84 = vector.shape_cast %83 : vector<8xf32> to vector<8x1xf32>
    %cst_26 = arith.constant 3.200000e+01 : f32
    %85 = vector.broadcast %cst_26 : f32 to vector<8x1xf32>
    %86 = arith.divf %84, %85 : vector<8x1xf32>
    %87 = vector.broadcast %86 : vector<8x1xf32> to vector<8x32xf32>
    %88 = arith.subf %42, %87 : vector<8x32xf32>
    %89 = arith.mulf %88, %88 : vector<8x32xf32>
    %cst_27 = arith.constant dense<0.000000e+00> : vector<8xf32>
    %90 = vector.multi_reduction <add>, %89, %cst_27 [1] : vector<8x32xf32> to vector<8xf32>
    %91 = vector.shape_cast %90 : vector<8xf32> to vector<8x1xf32>
    %cst_28 = arith.constant 3.200000e+01 : f32
    %92 = vector.broadcast %cst_28 : f32 to vector<8x1xf32>
    %93 = arith.divf %91, %92 : vector<8x1xf32>
    %cst_29 = arith.constant 9.99999974E-6 : f32
    %94 = vector.broadcast %cst_29 : f32 to vector<8x1xf32>
    %95 = arith.addf %93, %94 : vector<8x1xf32>
    %96 = math.rsqrt %95 : vector<8x1xf32>
    %97 = vector.broadcast %96 : vector<8x1xf32> to vector<8x32xf32>
    %98 = arith.mulf %88, %97 : vector<8x32xf32>
    %99 = vector.broadcast %82 : vector<1x32xf32> to vector<8x32xf32>
    %100 = arith.mulf %98, %99 : vector<8x32xf32>
    %101 = arith.addf %81, %100 : vector<8x32xf32>
    %102 = vector.extract_strided_slice %6 {offsets = [10, 0], sizes = [1, 32], strides = [1, 1]} : vector<16x32xf32> to vector<1x32xf32>
    %103 = vector.broadcast %102 : vector<1x32xf32> to vector<8x32xf32>
    %104 = arith.addf %101, %103 : vector<8x32xf32>
    %cst_30 = arith.constant 5.000000e-01 : f32
    %105 = vector.broadcast %cst_30 : f32 to vector<8x32xf32>
    %106 = arith.mulf %105, %104 : vector<8x32xf32>
    %cst_31 = arith.constant 0.707106769 : f32
    %107 = vector.broadcast %cst_31 : f32 to vector<8x32xf32>
    %108 = arith.mulf %104, %107 : vector<8x32xf32>
    %109 = math.erf %108 : vector<8x32xf32>
    %cst_32 = arith.constant 1.000000e+00 : f32
    %110 = vector.broadcast %cst_32 : f32 to vector<8x32xf32>
    %111 = arith.addf %110, %109 : vector<8x32xf32>
    %112 = arith.mulf %106, %111 : vector<8x32xf32>
    %c0_33 = arith.constant 0 : index
    %c0_34 = arith.constant 0 : index
    %c0_35 = arith.constant 0 : index
    %113 = vector.load %arg8[%c0_33, %c0_34, %c0_35] : memref<1x8x32xf32, #tpu.memory_space<vmem>>, vector<1x8x32xf32>
    %114 = vector.shape_cast %113 : vector<1x8x32xf32> to vector<8x32xf32>
    %115 = vector.shape_cast %112 : vector<8x32xf32> to vector<1x8x32xf32>
    tpu.vector_store %arg8[%c0_33, %c0_34, %c0_35], %115 {strides = array<i32>} : memref<1x8x32xf32, #tpu.memory_space<vmem>>, vector<1x8x32xf32>,
    return
  }
  func.func @transform_0(%arg0: i32, %arg1: i32) -> (i32, i32, i32) {
    %c0_i32 = arith.constant 0 : i32
    %c0_i32_0 = arith.constant 0 : i32
    return %arg0, %arg1, %c0_i32 : i32, i32, i32
  }
  func.func @transform_1(%arg0: i32, %arg1: i32) -> (i32, i32, i32) {
    %c0_i32 = arith.constant 0 : i32
    %c0_i32_0 = arith.constant 0 : i32
    return %arg0, %arg1, %c0_i32 : i32, i32, i32
  }
  func.func @transform_2(%arg0: i32, %arg1: i32) -> (i32, i32, i32) {
    %c0_i32 = arith.constant 0 : i32
    %c0_i32_0 = arith.constant 0 : i32
    return %arg0, %arg1, %c0_i32 : i32, i32, i32
  }
  func.func @transform_3(%arg0: i32, %arg1: i32) -> (i32, i32) {
    %c0_i32 = arith.constant 0 : i32
    %c0_i32_0 = arith.constant 0 : i32
    %c0_i32_1 = arith.constant 0 : i32
    return %c0_i32, %c0_i32_0 : i32, i32
  }
  func.func @transform_4(%arg0: i32, %arg1: i32) -> (i32, i32) {
    %c0_i32 = arith.constant 0 : i32
    %c0_i32_0 = arith.constant 0 : i32
    %c0_i32_1 = arith.constant 0 : i32
    return %c0_i32, %c0_i32_0 : i32, i32
  }
  func.func @transform_5(%arg0: i32, %arg1: i32) -> (i32, i32) {
    %c0_i32 = arith.constant 0 : i32
    %c0_i32_0 = arith.constant 0 : i32
    %c0_i32_1 = arith.constant 0 : i32
    return %c0_i32, %c0_i32_0 : i32, i32
  }
  func.func @transform_6(%arg0: i32, %arg1: i32) -> (i32, i32, i32) {
    %c0_i32 = arith.constant 0 : i32
    %c0_i32_0 = arith.constant 0 : i32
    return %arg0, %arg1, %c0_i32 : i32, i32, i32
  }
}

</mosaic_0001>

<llo_original>
// kernel: tpu_custom_call.1
$region0: #{tpu_custom_call.1}
  #allocation0 [shape = 'u32[]', space=smem, size = 0x4, offset = 0x4, fixed_abs, tag = 'smem constant byte address 0x4 - core index']
  #allocation1 [shape = 'u32[144,128]{1,0:T(1,128)}', space=vmem, size = 0x12000, scoped, tag = 'internal scratch']
  %s0 = inlined_call_operand.vmem [shape: f32[2,8,16], index: 0, kind: input, shape index: {}]
  %s1 = inlined_call_operand.vmem [shape: f32[2,8,48], index: 1, kind: input, shape index: {}]
  %s2 = inlined_call_operand.vmem [shape: f32[2,8,4], index: 2, kind: input, shape index: {}]
  %s3 = inlined_call_operand.vmem [shape: f32[16,32], index: 3, kind: input, shape index: {}]
  %s4 = inlined_call_operand.vmem [shape: f32[48,32], index: 4, kind: input, shape index: {}]
  %s5 = inlined_call_operand.vmem [shape: f32[16,32], index: 5, kind: input, shape index: {}]
  %s6 = inlined_call_operand.hbm [shape: f32[2,8,32], index: 6, kind: output, shape index: {}]
  %s7 = sld [smem:[#allocation0]]
  $region57: #{tpu_custom_call.1} parent=0
    _
  %s9 = ssub.s32 1, %s7
  %s10 = scalar_select 0, %s9, %s7
  $region1: #{tpu_custom_call.1} parent=0
    #allocation2 [shape = 'u8[8192]{0}', space=vmem, size = 0x2000, scoped, tag = 'output window, operand 0']
    #allocation3 [shape = 's32[2]{0}', space=sflag, size = 0x8, scoped, tag = 'scoped memory for tpu_custom_call.1']
    %11 = vsyncpa [#allocation3], 0
    %s12 = scalar_lea.sflag [#allocation3], 1
    %13 = vsyncpa %s12, 0
    loop: start=0, step=1, limit=4
    $region2: #{tpu_custom_call.1} parent=1 // loop_pre_header
      _
    $region3: #{tpu_custom_call.1} parent=1 // loop_header
      %s15 = sphi 0, %s19
      %p16 = scmp.ge.s32.totalorder %s15, 4
      %s22 = sphi 0, %s34
      %s23 = sphi 0, %s30
      %s24 = sphi 0, %s22
      %s25 = sphi 0, %s23
      %s26 = sphi 0, %s24
      %s27 = sphi 0, %s25
      %s39 = sphi 0, %s41
      %s42 = sphi 0, %s39
      %s43 = sphi 0, %s42
      %s59 = sphi 0, %s43
      %s67 = sphi 0, %s69
      %s70 = sphi 0, %s67
      %s71 = sphi 0, %s70
      %s87 = sphi 0, %s71
      %s95 = sphi 0, %s97
      %s98 = sphi 0, %s95
      %s99 = sphi 0, %s98
      %s115 = sphi 0, %s99
      %s119 = sphi 0, %s119
      %s121 = sphi 0, %s119
      %s122 = sphi 0, %s121
      %s136 = sphi 0, %s122
      %s140 = sphi 0, %s140
      %s142 = sphi 0, %s140
      %s143 = sphi 0, %s142
      %s157 = sphi 0, %s143
      %s161 = sphi 0, %s161
      %s163 = sphi 0, %s161
      %s164 = sphi 0, %s163
      %s178 = sphi 0, %s164
      %s186 = sphi 0, %s188
      %s189 = sphi 0, %s186
      %s190 = sphi 0, %s189
      %s206 = sphi 0, %s190
    $region4: #{tpu_custom_call.1} parent=1 // loop_header_branch
      %18 = sbr.rel (%p16) target = $region8
    $region5: #{tpu_custom_call.1} parent=1 // loop_body
      %s20 = ssub.s32 %s15, 1
      %s21 = ssub.s32 %s15, 2
      %s28 = sadd.s32 1, %s23
      %p29 = scmp.ge.s32.totalorder %s28, 1
      %s30 = scalar_select %p29, 0, %s28
      %s31 = sadd.s32 1, %s22
      %s32 = scalar_select %p29, %s31, %s22
      %p33 = scmp.ge.s32.totalorder %s32, 2
      %s34 = scalar_select %p33, 0, %s32
      %s35 = ssub.s32 %s22, %s34
      %s36 = ssub.s32 %s23, %s30
      %s37 = sor.u32 %s35, %s36
      %p38 = scmp.eq.s32.totalorder %s37, 0
      %s40 = sadd.s32 %s39, 1
      %s41 = scalar_select %p38, %s39, %s40
      %p44 = pneg %p38
      %p45 = scmp.eq.s32.totalorder %s15, 1
      %p46 = por %p44, %p45
      %p47 = scmp.ne.s32.totalorder %s39, %s42
      %p48 = scmp.eq.s32.totalorder %s15, 0
      %p49 = por %p47, %p48
      %p50 = scmp.ne.s32.totalorder %s39, %s42
      %p51 = scmp.eq.s32.totalorder %s20, 1
      %p52 = por %p50, %p51
      %p53 = scmp.ne.s32.totalorder %s42, %s43
      %p54 = scmp.eq.s32.totalorder %s20, 0
      %p55 = por %p53, %p54
      %p56 = scmp.ne.s32.totalorder %s42, %s43
      %p57 = scmp.eq.s32.totalorder %s21, 1
      %p58 = por %p56, %p57
      %p60 = scmp.ne.s32.totalorder %s43, %s59
      %p61 = scmp.eq.s32.totalorder %s21, 0
      %p62 = por %p60, %p61
      %s63 = ssub.s32 %s22, %s34
      %s64 = ssub.s32 %s23, %s30
      %s65 = sor.u32 %s63, %s64
      %p66 = scmp.eq.s32.totalorder %s65, 0
      %s68 = sadd.s32 %s67, 1
      %s69 = scalar_select %p66, %s67, %s68
      %p72 = pneg %p66
      %p73 = scmp.eq.s32.totalorder %s15, 1
      %p74 = por %p72, %p73
      %p75 = scmp.ne.s32.totalorder %s67, %s70
      %p76 = scmp.eq.s32.totalorder %s15, 0
      %p77 = por %p75, %p76
      %p78 = scmp.ne.s32.totalorder %s67, %s70
      %p79 = scmp.eq.s32.totalorder %s20, 1
      %p80 = por %p78, %p79
      %p81 = scmp.ne.s32.totalorder %s70, %s71
      %p82 = scmp.eq.s32.totalorder %s20, 0
      %p83 = por %p81, %p82
      %p84 = scmp.ne.s32.totalorder %s70, %s71
      %p85 = scmp.eq.s32.totalorder %s21, 1
      %p86 = por %p84, %p85
      %p88 = scmp.ne.s32.totalorder %s71, %s87
      %p89 = scmp.eq.s32.totalorder %s21, 0
      %p90 = por %p88, %p89
      %s91 = ssub.s32 %s22, %s34
      %s92 = ssub.s32 %s23, %s30
      %s93 = sor.u32 %s91, %s92
      %p94 = scmp.eq.s32.totalorder %s93, 0
      %s96 = sadd.s32 %s95, 1
      %s97 = scalar_select %p94, %s95, %s96
      %p100 = pneg %p94
      %p101 = scmp.eq.s32.totalorder %s15, 1
      %p102 = por %p100, %p101
      %p103 = scmp.ne.s32.totalorder %s95, %s98
      %p104 = scmp.eq.s32.totalorder %s15, 0
      %p105 = por %p103, %p104
      %p106 = scmp.ne.s32.totalorder %s95, %s98
      %p107 = scmp.eq.s32.totalorder %s20, 1
      %p108 = por %p106, %p107
      %p109 = scmp.ne.s32.totalorder %s98, %s99
      %p110 = scmp.eq.s32.totalorder %s20, 0
      %p111 = por %p109, %p110
      %p112 = scmp.ne.s32.totalorder %s98, %s99
      %p113 = scmp.eq.s32.totalorder %s21, 1
      %p114 = por %p112, %p113
      %p116 = scmp.ne.s32.totalorder %s99, %s115
      %p117 = scmp.eq.s32.totalorder %s21, 0
      %p118 = por %p116, %p117
      %s120 = sadd.s32 %s119, 1
      %p123 = scmp.eq.s32.totalorder %s15, 1
      %p124 = scmp.ne.s32.totalorder %s119, %s121
      %p125 = scmp.eq.s32.totalorder %s15, 0
      %p126 = por %p124, %p125
      %p127 = scmp.ne.s32.totalorder %s119, %s121
      %p128 = scmp.eq.s32.totalorder %s20, 1
      %p129 = por %p127, %p128
      %p130 = scmp.ne.s32.totalorder %s121, %s122
      %p131 = scmp.eq.s32.totalorder %s20, 0
      %p132 = por %p130, %p131
      %p133 = scmp.ne.s32.totalorder %s121, %s122
      %p134 = scmp.eq.s32.totalorder %s21, 1
      %p135 = por %p133, %p134
      %p137 = scmp.ne.s32.totalorder %s122, %s136
      %p138 = scmp.eq.s32.totalorder %s21, 0
      %p139 = por %p137, %p138
      %s141 = sadd.s32 %s140, 1
      %p144 = scmp.eq.s32.totalorder %s15, 1
      %p145 = scmp.ne.s32.totalorder %s140, %s142
      %p146 = scmp.eq.s32.totalorder %s15, 0
      %p147 = por %p145, %p146
      %p148 = scmp.ne.s32.totalorder %s140, %s142
      %p149 = scmp.eq.s32.totalorder %s20, 1
      %p150 = por %p148, %p149
      %p151 = scmp.ne.s32.totalorder %s142, %s143
      %p152 = scmp.eq.s32.totalorder %s20, 0
      %p153 = por %p151, %p152
      %p154 = scmp.ne.s32.totalorder %s142, %s143
      %p155 = scmp.eq.s32.totalorder %s21, 1
      %p156 = por %p154, %p155
      %p158 = scmp.ne.s32.totalorder %s143, %s157
      %p159 = scmp.eq.s32.totalorder %s21, 0
      %p160 = por %p158, %p159
      %s162 = sadd.s32 %s161, 1
      %p165 = scmp.eq.s32.totalorder %s15, 1
      %p166 = scmp.ne.s32.totalorder %s161, %s163
      %p167 = scmp.eq.s32.totalorder %s15, 0
      %p168 = por %p166, %p167
      %p169 = scmp.ne.s32.totalorder %s161, %s163
      %p170 = scmp.eq.s32.totalorder %s20, 1
      %p171 = por %p169, %p170
      %p172 = scmp.ne.s32.totalorder %s163, %s164
      %p173 = scmp.eq.s32.totalorder %s20, 0
      %p174 = por %p172, %p173
      %p175 = scmp.ne.s32.totalorder %s163, %s164
      %p176 = scmp.eq.s32.totalorder %s21, 1
      %p177 = por %p175, %p176
      %p179 = scmp.ne.s32.totalorder %s164, %s178
      %p180 = scmp.eq.s32.totalorder %s21, 0
      %p181 = por %p179, %p180
      %s182 = ssub.s32 %s22, %s34
      %s183 = ssub.s32 %s23, %s30
      %s184 = sor.u32 %s182, %s183
      %p185 = scmp.eq.s32.totalorder %s184, 0
      %s187 = sadd.s32 %s186, 1
      %s188 = scalar_select %p185, %s186, %s187
      %p191 = pneg %p185
      %p192 = scmp.eq.s32.totalorder %s15, 1
      %p193 = por %p191, %p192
      %p194 = scmp.ne.s32.totalorder %s186, %s189
      %p195 = scmp.eq.s32.totalorder %s15, 0
      %p196 = por %p194, %p195
      %p197 = scmp.ne.s32.totalorder %s186, %s189
      %p198 = scmp.eq.s32.totalorder %s20, 1
      %p199 = por %p197, %p198
      %p200 = scmp.ne.s32.totalorder %s189, %s190
      %p201 = scmp.eq.s32.totalorder %s20, 0
      %p202 = por %p200, %p201
      %p203 = scmp.ne.s32.totalorder %s189, %s190
      %p204 = scmp.eq.s32.totalorder %s21, 1
      %p205 = por %p203, %p204
      %p207 = scmp.ne.s32.totalorder %s190, %s206
      %p208 = scmp.eq.s32.totalorder %s21, 0
      %p209 = por %p207, %p208
      %p210 = scmp.le.s32.totalorder 1, %s15
      %p211 = scmp.lt.s32.totalorder %s15, 3
      %p212 = pnand %p210, %p211
      %p213 = pneg %p212
      // Predicated region
      $region9: #{tpu_custom_call.1} parent=5 // pred_check
        _
      $region10: #{tpu_custom_call.1} parent=5 // pred_check_branch
        %215 = sbr.rel (%p212) target = $region12
      $region11: #{tpu_custom_call.1} parent=5 // pred_region
        %s216 = ssub.s32 %s15, 1
        // Predicated region
        $region13: #{tpu_custom_call.1} parent=11 // pred_check
          %p217 = pneg %p132
        $region14: #{tpu_custom_call.1} parent=11 // pred_check_branch
          %219 = sbr.rel (%p217) target = $region16
        $region15: #{tpu_custom_call.1} parent=11 // pred_region
          _
        $region16: #{tpu_custom_call.1} parent=11 // pred_fallthru
          _
        // Predicated region
        $region17: #{tpu_custom_call.1} parent=11 // pred_check
          %p220 = pneg %p153
        $region18: #{tpu_custom_call.1} parent=11 // pred_check_branch
          %222 = sbr.rel (%p220) target = $region20
        $region19: #{tpu_custom_call.1} parent=11 // pred_region
          _
        $region20: #{tpu_custom_call.1} parent=11 // pred_fallthru
          _
        // Predicated region
        $region21: #{tpu_custom_call.1} parent=11 // pred_check
          %p223 = pneg %p174
        $region22: #{tpu_custom_call.1} parent=11 // pred_check_branch
          %225 = sbr.rel (%p223) target = $region24
        $region23: #{tpu_custom_call.1} parent=11 // pred_region
          _
        $region24: #{tpu_custom_call.1} parent=11 // pred_fallthru
          _
      $region12: #{tpu_custom_call.1} parent=5 // pred_fallthru
        _
      %p226 = scmp.lt.s32.totalorder %s15, 2
      // Predicated region
      $region25: #{tpu_custom_call.1} parent=5 // pred_check
        %p227 = pneg %p226
      $region26: #{tpu_custom_call.1} parent=5 // pred_check_branch
        %229 = sbr.rel (%p227) target = $region28
      $region27: #{tpu_custom_call.1} parent=5 // pred_region
        // Predicated region
        $region29: #{tpu_custom_call.1} parent=27 // pred_check
          %p230 = pneg %p49
        $region30: #{tpu_custom_call.1} parent=27 // pred_check_branch
          %232 = sbr.rel (%p230) target = $region32
        $region31: #{tpu_custom_call.1} parent=27 // pred_region
          %p233 = scmp.lt.s32.totalorder %s22, 1
          %s234 = scalar_select %p233, %s22, 1
          %p235 = scmp.lt.s32.totalorder %s23, 0
          %s236 = scalar_select %p235, %s23, 0
          %s237 = sadd.s32 %s236, %s234
          %s238 = smul.addr %s237, 8
          %s239 = scalar_lea.vmem %s0, %s238
        $region32: #{tpu_custom_call.1} parent=27 // pred_fallthru
          _
        // Predicated region
        $region33: #{tpu_custom_call.1} parent=27 // pred_check
          %p240 = pneg %p77
        $region34: #{tpu_custom_call.1} parent=27 // pred_check_branch
          %242 = sbr.rel (%p240) target = $region36
        $region35: #{tpu_custom_call.1} parent=27 // pred_region
          %p243 = scmp.lt.s32.totalorder %s22, 1
          %s244 = scalar_select %p243, %s22, 1
          %p245 = scmp.lt.s32.totalorder %s23, 0
          %s246 = scalar_select %p245, %s23, 0
          %s247 = sadd.s32 %s246, %s244
          %s248 = smul.addr %s247, 8
          %s249 = scalar_lea.vmem %s1, %s248
        $region36: #{tpu_custom_call.1} parent=27 // pred_fallthru
          _
        // Predicated region
        $region37: #{tpu_custom_call.1} parent=27 // pred_check
          %p250 = pneg %p105
        $region38: #{tpu_custom_call.1} parent=27 // pred_check_branch
          %252 = sbr.rel (%p250) target = $region40
        $region39: #{tpu_custom_call.1} parent=27 // pred_region
          %p253 = scmp.lt.s32.totalorder %s22, 1
          %s254 = scalar_select %p253, %s22, 1
          %p255 = scmp.lt.s32.totalorder %s23, 0
          %s256 = scalar_select %p255, %s23, 0
          %s257 = sadd.s32 %s256, %s254
          %s258 = smul.addr %s257, 8
          %s259 = scalar_lea.vmem %s2, %s258
        $region40: #{tpu_custom_call.1} parent=27 // pred_fallthru
          _
      $region28: #{tpu_custom_call.1} parent=5 // pred_fallthru
        _
      %p260 = scmp.le.s32.totalorder 1, %s15
      %p261 = scmp.lt.s32.totalorder %s15, 3
      %p262 = pnand %p260, %p261
      %p263 = pneg %p262
      // Predicated region
      $region41: #{tpu_custom_call.1} parent=5 // pred_check
        _
      $region42: #{tpu_custom_call.1} parent=5 // pred_check_branch
        %265 = sbr.rel (%p262) target = $region44
      $region43: #{tpu_custom_call.1} parent=5 // pred_region
        %s266 = ssub.s32 %s15, 1
        %p267 = scmp.lt.s32.totalorder %s24, 1
        %s268 = scalar_select %p267, %s24, 1
        %p269 = scmp.lt.s32.totalorder %s25, 0
        %s270 = scalar_select %p269, %s25, 0
        %s271 = sadd.s32 %s270, %s268
        %s272 = smul.addr %s271, 8
        %s273 = scalar_lea.vmem %s0, %s272
        %p274 = pneg %p55
        %p275 = pneg %p52
        %p276 = scmp.lt.s32.totalorder %s24, 1
        %s277 = scalar_select %p276, %s24, 1
        %p278 = scmp.lt.s32.totalorder %s25, 0
        %s279 = scalar_select %p278, %s25, 0
        %s280 = sadd.s32 %s279, %s277
        %s281 = smul.addr %s280, 8
        %s282 = scalar_lea.vmem %s1, %s281
        %p283 = pneg %p83
        %p284 = pneg %p80
        %p285 = scmp.lt.s32.totalorder %s24, 1
        %s286 = scalar_select %p285, %s24, 1
        %p287 = scmp.lt.s32.totalorder %s25, 0
        %s288 = scalar_select %p287, %s25, 0
        %s289 = sadd.s32 %s288, %s286
        %s290 = smul.addr %s289, 8
        %s291 = scalar_lea.vmem %s2, %s290
        %p292 = pneg %p111
        %p293 = pneg %p108
        %p294 = pneg %p132
        %p295 = pneg %p129
        %p296 = pneg %p153
        %p297 = pneg %p150
        %p298 = pneg %p174
        %p299 = pneg %p171
        %p300 = pneg %p202
        %p301 = pneg %p199
        %s302 = sand.u32 %s189, 1
        %s303 = scalar_lea.sflag [#allocation3], %s302
        %s304 = sand.u32 %s189, 1
        %s305 = smul.addr %s304, 8
        %s306 = scalar_lea.vmem [#allocation2], %s305
        %p307 = scmp.lt.s32.totalorder %s24, 1
        %s308 = scalar_select %p307, %s24, 1
        %p309 = scmp.lt.s32.totalorder %s25, 0
        %s310 = scalar_select %p309, %s25, 0
        %s311 = sadd.s32 %s310, %s308
        %s312 = smul.addr %s311, 8
        %s313 = scalar_lea.vmem %s0, %s312
        %p314 = scmp.lt.s32.totalorder %s24, 1
        %s315 = scalar_select %p314, %s24, 1
        %p316 = scmp.lt.s32.totalorder %s25, 0
        %s317 = scalar_select %p316, %s25, 0
        %s318 = sadd.s32 %s317, %s315
        %s319 = smul.addr %s318, 8
        %s320 = scalar_lea.vmem %s1, %s319
        %p321 = scmp.lt.s32.totalorder %s24, 1
        %s322 = scalar_select %p321, %s24, 1
        %p323 = scmp.lt.s32.totalorder %s25, 0
        %s324 = scalar_select %p323, %s25, 0
        %s325 = sadd.s32 %s324, %s322
        %s326 = smul.addr %s325, 8
        %s327 = scalar_lea.vmem %s2, %s326
        %v328 = vld [vmem:[%s313] sm:$0xff]
        %v329 = vld [vmem:[%s320] sm:$0xff]
        %v330 = vld [vmem:[%s327] sm:$0xff]
        %v331 = vld [vmem:[%s5] sm:$0xff]
        %v332 = vld [vmem:[%s5 + $0x8] sm:$0xff]
        %v333 = vld [vmem:[%s3] sm:$0xff]
        %v334 = vld [vmem:[%s3 + $0x8] sm:$0xff]
        %v335 = vlaneseq
        %v336 = vshrl.u32 %v335, 7
        %v337 = vsub.s32 4, %v336
        %v338 = vrot.slane %v331, %v337
        %vm339 = vcmask 130048
        %v341 = vsel %vm339, %v328, 0
        %343 = vmatprep.subr.mxu0 0.0
        %344 = vmatpush1.msra.mxu0 0.0
        %345 = vmatprep.subr.mxu0 0.0
        %346 = vmatpush1.msra.mxu0 0.0
        %347 = vmatprep.subr.mxu0 0.0
        %348 = vmatpush1.msra.mxu0 0.0
        %349 = vmatprep.subr.mxu0 0.0
        %350 = vmatpush1.msra.mxu0 0.0
        %351 = vmatprep.subr.mxu0 0.0
        %352 = vmatpush1.msra.mxu0 0.0
        %353 = vmatprep.subr.mxu0 0.0
        %354 = vmatpush1.msra.mxu0 0.0
        %355 = vmatprep.subr.mxu0 0.0
        %356 = vmatpush1.msra.mxu0 0.0
        %357 = vmatprep.subr.mxu0 0.0
        %358 = vmatpush1.msra.mxu0 0.0
        %359 = vmatprep.subr.mxu0 0.0
        %360 = vmatpush1.msra.mxu0 0.0
        %361 = vmatprep.subr.mxu0 0.0
        %362 = vmatpush1.msra.mxu0 0.0
        %363 = vmatprep.subr.mxu0 0.0
        %364 = vmatpush1.msra.mxu0 0.0
        %365 = vmatprep.subr.mxu0 0.0
        %366 = vmatpush1.msra.mxu0 0.0
        %367 = vmatprep.subr.mxu0 0.0
        %368 = vmatpush1.msra.mxu0 0.0
        %369 = vmatprep.subr.mxu0 0.0
        %370 = vmatpush1.msra.mxu0 0.0
        %371 = vmatprep.subr.mxu0 0.0
        %372 = vmatpush1.msra.mxu0 %v334
        %373 = vmatprep.subr.mxu0 0.0
        %374 = vmatpush1.msra.mxu0 %v333
        %375 = vmatprep.subr.mxu0 0.0
        %376 = vmatpush2.msra.mxu0 0.0
        %377 = vmatprep.subr.mxu0 0.0
        %378 = vmatpush2.msra.mxu0 0.0
        %379 = vmatprep.subr.mxu0 0.0
        %380 = vmatpush2.msra.mxu0 0.0
        %381 = vmatprep.subr.mxu0 0.0
        %382 = vmatpush2.msra.mxu0 0.0
        %383 = vmatprep.subr.mxu0 0.0
        %384 = vmatpush2.msra.mxu0 0.0
        %385 = vmatprep.subr.mxu0 0.0
        %386 = vmatpush2.msra.mxu0 0.0
        %387 = vmatprep.subr.mxu0 0.0
        %388 = vmatpush2.msra.mxu0 0.0
        %389 = vmatprep.subr.mxu0 0.0
        %390 = vmatpush2.msra.mxu0 0.0
        %391 = vmatprep.subr.mxu0 0.0
        %392 = vmatpush2.msra.mxu0 0.0
        %393 = vmatprep.subr.mxu0 0.0
        %394 = vmatpush2.msra.mxu0 0.0
        %395 = vmatprep.subr.mxu0 0.0
        %396 = vmatpush2.msra.mxu0 0.0
        %397 = vmatprep.subr.mxu0 0.0
        %398 = vmatpush2.msra.mxu0 0.0
        %399 = vmatprep.subr.mxu0 0.0
        %400 = vmatpush2.msra.mxu0 0.0
        %401 = vmatprep.subr.mxu0 0.0
        %402 = vmatpush2.msra.mxu0 0.0
        %403 = vmatprep.subr.mxu0 0.0
        %404 = vmatpush2.msra.mxu0 0.0
        %405 = vmatprep.subr.mxu0 0.0
        %406 = vmatpush2.msra.mxu0 0.0
        %407 = vmatprep.mubr.f32.mxu0 0.0
        %408 = vmatmul.mubr.f32.gmra.mxu0 %v341
        %v409 = vpop.f32.mrf.mxu0
        %v410 = vadd.f32 %v338, %v409
        %v411 = vpop.f32.mrf.mxu0
        %412 = vdwg.mxu0
        %v413 = vld [vmem:[%s4] sm:$0xff]
        %v414 = vld [vmem:[%s4 + $0x8] sm:$0xff]
        %v415 = vld [vmem:[%s4 + $0x10] sm:$0xff]
        %v416 = vld [vmem:[%s4 + $0x18] sm:$0xff]
        %v417 = vld [vmem:[%s4 + $0x20] sm:$0xff]
        %v418 = vld [vmem:[%s4 + $0x28] sm:$0xff]
        %v419 = vlaneseq
        %v420 = vshrl.u32 %v419, 7
        %v421 = vsub.s32 5, %v420
        %v422 = vrot.slane %v331, %v421
        %vm423 = vcmask 392192
        %v425 = vsel %vm423, %v329, 0
        %427 = vmatprep.subr.mxu0 0.0
        %428 = vmatpush1.msra.mxu0 0.0
        %429 = vmatprep.subr.mxu0 0.0
        %430 = vmatpush1.msra.mxu0 0.0
        %431 = vmatprep.subr.mxu0 0.0
        %432 = vmatpush1.msra.mxu0 0.0
        %433 = vmatprep.subr.mxu0 0.0
        %434 = vmatpush1.msra.mxu0 0.0
        %435 = vmatprep.subr.mxu0 0.0
        %436 = vmatpush1.msra.mxu0 0.0
        %437 = vmatprep.subr.mxu0 0.0
        %438 = vmatpush1.msra.mxu0 0.0
        %439 = vmatprep.subr.mxu0 0.0
        %440 = vmatpush1.msra.mxu0 0.0
        %441 = vmatprep.subr.mxu0 0.0
        %442 = vmatpush1.msra.mxu0 0.0
        %443 = vmatprep.subr.mxu0 0.0
        %444 = vmatpush1.msra.mxu0 0.0
        %445 = vmatprep.subr.mxu0 0.0
        %446 = vmatpush1.msra.mxu0 0.0
        %447 = vmatprep.subr.mxu0 0.0
        %448 = vmatpush1.msra.mxu0 %v418
        %449 = vmatprep.subr.mxu0 0.0
        %450 = vmatpush1.msra.mxu0 %v417
        %451 = vmatprep.subr.mxu0 0.0
        %452 = vmatpush1.msra.mxu0 %v416
        %453 = vmatprep.subr.mxu0 0.0
        %454 = vmatpush1.msra.mxu0 %v415
        %455 = vmatprep.subr.mxu0 0.0
        %456 = vmatpush1.msra.mxu0 %v414
        %457 = vmatprep.subr.mxu0 0.0
        %458 = vmatpush1.msra.mxu0 %v413
        %459 = vmatprep.subr.mxu0 0.0
        %460 = vmatpush2.msra.mxu0 0.0
        %461 = vmatprep.subr.mxu0 0.0
        %462 = vmatpush2.msra.mxu0 0.0
        %463 = vmatprep.subr.mxu0 0.0
        %464 = vmatpush2.msra.mxu0 0.0
        %465 = vmatprep.subr.mxu0 0.0
        %466 = vmatpush2.msra.mxu0 0.0
        %467 = vmatprep.subr.mxu0 0.0
        %468 = vmatpush2.msra.mxu0 0.0
        %469 = vmatprep.subr.mxu0 0.0
        %470 = vmatpush2.msra.mxu0 0.0
        %471 = vmatprep.subr.mxu0 0.0
        %472 = vmatpush2.msra.mxu0 0.0
        %473 = vmatprep.subr.mxu0 0.0
        %474 = vmatpush2.msra.mxu0 0.0
        %475 = vmatprep.subr.mxu0 0.0
        %476 = vmatpush2.msra.mxu0 0.0
        %477 = vmatprep.subr.mxu0 0.0
        %478 = vmatpush2.msra.mxu0 0.0
        %479 = vmatprep.subr.mxu0 0.0
        %480 = vmatpush2.msra.mxu0 0.0
        %481 = vmatprep.subr.mxu0 0.0
        %482 = vmatpush2.msra.mxu0 0.0
        %483 = vmatprep.subr.mxu0 0.0
        %484 = vmatpush2.msra.mxu0 0.0
        %485 = vmatprep.subr.mxu0 0.0
        %486 = vmatpush2.msra.mxu0 0.0
        %487 = vmatprep.subr.mxu0 0.0
        %488 = vmatpush2.msra.mxu0 0.0
        %489 = vmatprep.subr.mxu0 0.0
        %490 = vmatpush2.msra.mxu0 0.0
        %491 = vmatprep.mubr.f32.mxu0 0.0
        %492 = vmatmul.mubr.f32.gmra.mxu0 %v425
        %v493 = vpop.f32.mrf.mxu0
        %v494 = vadd.f32 %v422, %v493
        %v495 = vpop.f32.mrf.mxu0
        %496 = vdwg.mxu0
        %498 = vset.pattern.permute.xlu0 0
        %499 = vperm.xlu0 %498, %v330
        %v500 = vpop.permute.xlu0 %499
        %v502 = vlaneseq
        %v503 = vshrl.u32 %v502, 7
        %v504 = vsub.s32 0, %v503
        %v505 = vrot.slane %v331, %v504
        %v506 = vmul.f32 %v500, %v505
        %507 = vset.pattern.permute.xlu0 1
        %508 = vperm.xlu0 %507, %v330
        %v509 = vpop.permute.xlu0 %508
        %v511 = vlaneseq
        %v512 = vshrl.u32 %v511, 7
        %v513 = vsub.s32 1, %v512
        %v514 = vrot.slane %v331, %v513
        %v515 = vmul.f32 %v509, %v514
        %v516 = vadd.f32 %v506, %v515
        %517 = vset.pattern.permute.xlu0 2
        %518 = vperm.xlu0 %517, %v330
        %v519 = vpop.permute.xlu0 %518
        %v521 = vlaneseq
        %v522 = vshrl.u32 %v521, 7
        %v523 = vsub.s32 2, %v522
        %v524 = vrot.slane %v331, %v523
        %v525 = vmul.f32 %v519, %v524
        %v526 = vadd.f32 %v516, %v525
        %527 = vset.pattern.permute.xlu0 3
        %528 = vperm.xlu0 %527, %v330
        %v529 = vpop.permute.xlu0 %528
        %v531 = vlaneseq
        %v532 = vshrl.u32 %v531, 7
        %v533 = vsub.s32 3, %v532
        %v534 = vrot.slane %v331, %v533
        %v535 = vmul.f32 %v529, %v534
        %v536 = vadd.f32 %v526, %v535
        %v537 = vlaneseq
        %v538 = vshrl.u32 %v537, 7
        %v539 = vsub.s32 6, %v538
        %v540 = vrot.slane %v331, %v539
        %v541 = vadd.f32 %v536, %v540
        %vm542 = vcmask 261120
        %v543 = vsel %vm542, %v410, 0.0
        %544 = vadd.xlane.f32.xlu0 %v543
        %v545 = vpop.xlane.xlu0 %544
        %v546 = vrcp.pop 32.0
        %v547 = vmul.f32 %v545, %v546
        %v548 = vsub.f32 %v410, %v547
        %v549 = vmul.f32 %v548, %v548
        %v550 = vsel %vm542, %v549, 0.0
        %551 = vadd.xlane.f32.xlu0 %v550
        %v552 = vpop.xlane.xlu0 %551
        %v553 = vmul.f32 %v552, %v546
        %v554 = vadd.f32 %v553, 1e-05
        %v555 = vrsqrt.pop %v554
        %v556 = vmul.f32 %v548, %v555
        %v557 = vlaneseq
        %v558 = vshrl.u32 %v557, 7
        %v559 = vsub.s32 7, %v558
        %v560 = vrot.slane %v331, %v559
        %v561 = vmul.f32 %v556, %v560
        %v562 = vsel %vm542, %v494, 0.0
        %563 = vadd.xlane.f32.xlu0 %v562
        %v564 = vpop.xlane.xlu0 %563
        %v565 = vmul.f32 %v564, %v546
        %v566 = vsub.f32 %v494, %v565
        %v567 = vmul.f32 %v566, %v566
        %v568 = vsel %vm542, %v567, 0.0
        %569 = vadd.xlane.f32.xlu0 %v568
        %v570 = vpop.xlane.xlu0 %569
        %v571 = vmul.f32 %v570, %v546
        %v572 = vadd.f32 %v571, 1e-05
        %v573 = vrsqrt.pop %v572
        %v574 = vmul.f32 %v566, %v573
        %v575 = vlaneseq
        %v576 = vshrl.u32 %v575, 7
        %v577 = vsub.s32 0, %v576
        %v578 = vrot.slane %v332, %v577
        %v579 = vmul.f32 %v574, %v578
        %v580 = vadd.f32 %v561, %v579
        %v581 = vsel %vm542, %v541, 0.0
        %582 = vadd.xlane.f32.xlu0 %v581
        %v583 = vpop.xlane.xlu0 %582
        %v584 = vmul.f32 %v583, %v546
        %v585 = vsub.f32 %v541, %v584
        %v586 = vmul.f32 %v585, %v585
        %v587 = vsel %vm542, %v586, 0.0
        %588 = vadd.xlane.f32.xlu0 %v587
        %v589 = vpop.xlane.xlu0 %588
        %v590 = vmul.f32 %v589, %v546
        %v591 = vadd.f32 %v590, 1e-05
        %v592 = vrsqrt.pop %v591
        %v593 = vmul.f32 %v585, %v592
        %v594 = vlaneseq
        %v595 = vshrl.u32 %v594, 7
        %v596 = vsub.s32 1, %v595
        %v597 = vrot.slane %v332, %v596
        %v598 = vmul.f32 %v593, %v597
        %v599 = vadd.f32 %v580, %v598
        %v600 = vlaneseq
        %v601 = vshrl.u32 %v600, 7
        %v602 = vsub.s32 2, %v601
        %v603 = vrot.slane %v332, %v602
        %v604 = vadd.f32 %v599, %v603
        %v605 = vmul.f32 %v604, 0.5
        %v606 = vmul.f32 %v604, 0.70710677
        %v607 = verf.f32.pop %v606
        %v608 = vadd.f32 %v607, 1.0
        %v609 = vmul.f32 %v605, %v608
        %610 = vst.msk [vmem:[%s306] sm:$0xff] %vm542, %v609
        %s611 = sand.u32 %s189, 1
        %s612 = scalar_lea.sflag [#allocation3], %s611
        %s613 = sand.u32 %s189, 1
        %s614 = smul.addr %s613, 8
        %s615 = scalar_lea.vmem [#allocation2], %s614
        // Predicated region
        $region45: #{tpu_custom_call.1} parent=43 // pred_check
          %p616 = pneg %p199
        $region46: #{tpu_custom_call.1} parent=43 // pred_check_branch
          %618 = sbr.rel (%p616) target = $region48
        $region47: #{tpu_custom_call.1} parent=43 // pred_region
          %s620 = ssub.s32 128, 128
          %621 = vsyncadd %s612, %s620
          %s622 = sadd.s32 %s25, %s24
          %s623 = smul.addr %s622, 128
          %s624 = scalar_lea.hbm %s6, %s623
          %s626 = sshll.u32 %s615, 4
          %s627 = int_to_ptr.vmem [resolvable:$true] %s626
          %629 = dma.vmem_to_hbm [thread:$0]  %s627, 128, %s624, %s612
        $region48: #{tpu_custom_call.1} parent=43 // pred_fallthru
          _
      $region44: #{tpu_custom_call.1} parent=5 // pred_fallthru
        _
      %p630 = scmp.le.s32.totalorder 2, %s15
      // Predicated region
      $region49: #{tpu_custom_call.1} parent=5 // pred_check
        %p631 = pneg %p630
      $region50: #{tpu_custom_call.1} parent=5 // pred_check_branch
        %633 = sbr.rel (%p631) target = $region52
      $region51: #{tpu_custom_call.1} parent=5 // pred_region
        %s634 = ssub.s32 %s15, 2
        // Predicated region
        $region53: #{tpu_custom_call.1} parent=51 // pred_check
          %p635 = pneg %p205
        $region54: #{tpu_custom_call.1} parent=51 // pred_check_branch
          %637 = sbr.rel (%p635) target = $region56
        $region55: #{tpu_custom_call.1} parent=51 // pred_region
          %s638 = sand.u32 %s190, 1
          %s639 = scalar_lea.sflag [#allocation3], %s638
          %s640 = sand.u32 %s190, 1
          %s641 = smul.addr %s640, 8
          %s642 = scalar_lea.vmem [#allocation2], %s641
          %643 = dma.done %s639, 128
        $region56: #{tpu_custom_call.1} parent=51 // pred_fallthru
          _
      $region52: #{tpu_custom_call.1} parent=5 // pred_fallthru
        _
    $region6: #{tpu_custom_call.1} parent=1 // loop_footer
      %s19 = sadd.s32 1, %s15
    $region7: #{tpu_custom_call.1} parent=1 // loop_footer_branch
      %14 = sbr.rel target = $region3
    $region8: #{tpu_custom_call.1} parent=1 // loop_exit
      _
    %644 = vsyncpa [#allocation3], 1
    %s645 = scalar_lea.sflag [#allocation3], 1
    %646 = vsyncpa %s645, 1

</llo_original>
